<compile_context>
chip_gen: v6e
topology: v6e:2x2x1
jax: 0.10.0
libtpu: 0.0.40
codegen_flags: <defaults>
</compile_context>

<pallas_src>
import functools

import jax
import jax.numpy as jnp
import numpy as np
from jax import lax
from jax.experimental import pallas as pl
from jax.experimental.pallas import tpu as pltpu

EPS = 1e-5          # nn.InstanceNorm2d default eps (affine=False, biased variance)
NEG_SLOPE = 0.2     # LeakyReLU negative slope


def _round_up(x, m):
    return (x + m - 1) // m * m


def _instancenorm_lrelu(z):
    """z: (C, HW) f32 -> InstanceNorm2d(affine=False) + LeakyReLU(0.2), f32."""
    m = jnp.mean(z, axis=1, keepdims=True)                      # lane reduce
    v = jnp.mean(jnp.square(z - m), axis=1, keepdims=True)      # biased variance
    y = (z - m) * lax.rsqrt(v + EPS)
    return jnp.where(y >= 0, y, NEG_SLOPE * y)


def _make_taps(src, pad_ref, h, w):
    """Build the 9 shifted taps of a 3x3 'same' conv entirely in VMEM.

    src: (C, H*W) f32 (row-major flattened image).
    pad_ref: (C, H*W + 2*(W+1)) f32 VMEM scratch used as a zero-padded flat copy.
    Returns (9*C, H*W) bf16 with rows ordered (kh, kw, c) to match the reshaped
    PyTorch conv weight.
    """
    c, hw = src.shape
    off = w + 1
    # zero-padded flat image: pad_ref[:, off + q] = src[:, q], zeros outside.
    pad_ref[:, :off] = jnp.zeros((c, off), jnp.float32)
    pad_ref[:, off + hw:] = jnp.zeros((c, off), jnp.float32)
    pad_ref[:, off:off + hw] = src

    col = lax.broadcasted_iota(jnp.int32, (1, hw), 1) % w       # pixel column index
    taps = []
    for dh in (-1, 0, 1):
        for dw in (-1, 0, 1):
            base = off + dh * w + dw                            # static lane offset
            t = pad_ref[:, base:base + hw]
            if dw != 0:
                # out-of-image rows already hit the zero pad; only mask column wrap.
                ok = jnp.logical_and(col + dw >= 0, col + dw < w)
                t = jnp.where(ok, t, jnp.zeros_like(t))
            taps.append(t)
    # 8-aligned sublane concat -> single K = 9*C matmul operand, bf16 for the MXU.
    return jnp.concatenate(taps, axis=0).astype(jnp.bfloat16)


def convblock_kernel(x_ref, w1_ref, w2_ref, wf_ref, wc_ref, o_ref,
                     xpad_ref, ypad_ref, *, h, w):
    # ---- conv1 (3x3, no bias) + InstanceNorm + LeakyReLU --------------------
    p1 = _make_taps(x_ref[...].astype(jnp.float32), xpad_ref, h, w)   # (9*Cin, HW) bf16
    z1 = jnp.dot(w1_ref[...], p1, preferred_element_type=jnp.float32)  # (Cintra, HW) f32
    y1 = _instancenorm_lrelu(z1)
    # (Dropout2d: identity in eval mode.)

    # ---- conv2 (3x3, no bias) + InstanceNorm + LeakyReLU --------------------
    p2 = _make_taps(y1, ypad_ref, h, w)                                # (9*Cintra, HW) bf16
    z2 = jnp.dot(w2_ref[...], p2, preferred_element_type=jnp.float32)  # (Cout, HW) f32
    y2 = _instancenorm_lrelu(z2)

    # ---- FrequencyAttenLayer: 1x1 conv (Cout -> 1) + sigmoid, broadcast-mul -
    # computed as a VPU multiply + sublane reduce (no MXU).
    s = jax.nn.sigmoid(jnp.sum(y2 * wf_ref[...], axis=0, keepdims=True))  # (1, HW)
    freq = s * y2

    # ---- ChannelAttenLayer: L1 over pixels -> Linear(no bias) -> sigmoid ----
    l1 = jnp.sum(jnp.abs(y2), axis=1, keepdims=True)                   # (Cout, 1)
    a = jax.nn.sigmoid(jnp.dot(wc_ref[...], l1,
                               preferred_element_type=jnp.float32))    # (Cout, 1)
    chan = a * y2

    # ---- AttenLayer: element-wise maximum; lane-dense full-tile store -------
    o_ref[...] = jnp.maximum(freq, chan)


def conv_block_forward(x_nchw, w1_t, w2_t, wf_t, wc_t):
    """ConvBlock forward. x_nchw: (N, Cin, H, W); PyTorch parameter layouts:
       w1_t: (Cintra, Cin, 3, 3), w2_t: (Cout, Cintra, 3, 3),
       wf_t: (1, Cout, 1, 1), wc_t: (Cout, Cout)."""
    n, cin, h, w = x_nchw.shape
    hw = h * w
    cintra, cout = w1_t.shape[0], w2_t.shape[0]
    cin_p = _round_up(cin, 8)
    cintra_p = _round_up(cintra, 8)
    cout_p = _round_up(cout, 8)
    hwp = hw + 2 * (w + 1)   # flat image + zero pads for the 3x3 shifts

    # Activations: (N, C, H*W), pixels on the lane axis, bf16 in HBM.
    x = jnp.pad(x_nchw.reshape(n, cin, hw),
                ((0, 0), (0, cin_p - cin), (0, 0))).astype(jnp.bfloat16)

    def pack_w(wt, co_p, ci_p):
        co, ci = wt.shape[0], wt.shape[1]
        wp = jnp.pad(wt, ((0, co_p - co), (0, ci_p - ci), (0, 0), (0, 0)))
        # (Cout, Cin, kh, kw) -> (Cout, kh, kw, Cin) -> (Cout, 9*Cin): column index
        # (kh*3 + kw)*Cin + c matches the tap row order built in _make_taps.
        return jnp.transpose(wp, (0, 2, 3, 1)).reshape(co_p, 9 * ci_p).astype(jnp.bfloat16)

    w1 = pack_w(w1_t, cintra_p, cin_p)                       # (Cintra_p, 9*Cin_p) bf16
    w2 = pack_w(w2_t, cout_p, cintra_p)                      # (Cout_p, 9*Cintra_p) bf16
    wf = jnp.pad(wf_t.reshape(cout, 1),
                 ((0, cout_p - cout), (0, 0))).astype(jnp.float32)      # (Cout_p, 1)
    wc = jnp.pad(wc_t, ((0, cout_p - cout), (0, cout_p - cout))).astype(jnp.float32)

    kernel = functools.partial(convblock_kernel, h=h, w=w)
    y = pl.pallas_call(
        kernel,
        out_shape=jax.ShapeDtypeStruct((n, cout_p, hw), jnp.float32),
        grid_spec=pltpu.PrefetchScalarGridSpec(
            num_scalar_prefetch=0,
            grid=(n,),
            in_specs=[
                pl.BlockSpec((None, cin_p, hw), lambda b: (b, 0, 0)),      # x
                pl.BlockSpec((cintra_p, 9 * cin_p), lambda b: (0, 0)),     # w1
                pl.BlockSpec((cout_p, 9 * cintra_p), lambda b: (0, 0)),    # w2
                pl.BlockSpec((cout_p, 1), lambda b: (0, 0)),               # wf
                pl.BlockSpec((cout_p, cout_p), lambda b: (0, 0)),          # wc
            ],
            out_specs=pl.BlockSpec((None, cout_p, hw), lambda b: (b, 0, 0)),
            scratch_shapes=[
                pltpu.VMEM((cin_p, hwp), jnp.float32),     # padded flat x
                pltpu.VMEM((cintra_p, hwp), jnp.float32),  # padded flat y1
            ],
        ),
        compiler_params=pltpu.CompilerParams(
            dimension_semantics=("parallel",),
            vmem_limit_bytes=32 * 1024 * 1024,
        ),
    )(x, w1, w2, wf, wc)

    return y[:, :cout, :].reshape(n, cout, h, w)


def conv_block_reference(x, w1, w2, wf, wc):
    """Pure-JAX reference (mirrors the kernel's bf16 operand rounding)."""
    f32 = jnp.float32
    bf = lambda t: t.astype(jnp.bfloat16).astype(f32)

    def conv3x3(inp, wt):
        return lax.conv_general_dilated(bf(inp), bf(wt), (1, 1), "SAME",
                                        dimension_numbers=("NCHW", "OIHW", "NCHW"))

    def inorm_lrelu(z):
        m = jnp.mean(z, axis=(2, 3), keepdims=True)
        v = jnp.mean(jnp.square(z - m), axis=(2, 3), keepdims=True)
        y = (z - m) * lax.rsqrt(v + EPS)
        return jnp.where(y >= 0, y, NEG_SLOPE * y)

    y1 = inorm_lrelu(conv3x3(x, w1))
    y2 = inorm_lrelu(conv3x3(y1, w2))
    s = jax.nn.sigmoid(jnp.einsum("c,nchw->nhw", wf.reshape(-1), y2))[:, None]
    freq = s * y2
    l1 = jnp.sum(jnp.abs(y2), axis=(2, 3))           # (N, Cout)
    a = jax.nn.sigmoid(l1 @ wc.T)                    # (N, Cout)
    chan = a[:, :, None, None] * y2
    return jnp.maximum(freq, chan)


if __name__ == "__main__":
    # ConvBlock(in_channels=4, intra_channels=8, out_channels=8, drop_prob=0.0)
    N, CIN, CINTRA, COUT, H, W = 2, 4, 8, 8, 16, 16

    key = jax.random.PRNGKey(0)
    kx, k1, k2, kf, kc = jax.random.split(key, 5)

    x = jax.random.normal(kx, (N, CIN, H, W), jnp.float32)
    w1 = 0.1 * jax.random.normal(k1, (CINTRA, CIN, 3, 3), jnp.float32)
    w2 = 0.1 * jax.random.normal(k2, (COUT, CINTRA, 3, 3), jnp.float32)
    wf = 0.1 * jax.random.normal(kf, (1, COUT, 1, 1), jnp.float32)
    wc = 0.1 * jax.random.normal(kc, (COUT, COUT), jnp.float32)

    out = jax.jit(conv_block_forward)(x, w1, w2, wf, wc)
    out = jax.block_until_ready(out)
    assert out.shape == (N, COUT, H, W), out.shape

    ref = jax.block_until_ready(jax.jit(conv_block_reference)(x, w1, w2, wf, wc))
    np.testing.assert_allclose(np.asarray(out), np.asarray(ref), atol=5e-2, rtol=5e-2)
    print("KERNEL_OK")
</pallas_src>

<mosaic_0001>
module attributes {stable_mosaic.version = 11 : i64} {
  func.func @convblock_kernel(%arg0: i32, %arg1: memref<1x8x256xbf16, #tpu.memory_space<vmem>>, %arg2: memref<8x72xbf16, #tpu.memory_space<vmem>>, %arg3: memref<8x72xbf16, #tpu.memory_space<vmem>>, %arg4: memref<8x1xf32, #tpu.memory_space<vmem>>, %arg5: memref<8x8xf32, #tpu.memory_space<vmem>>, %arg6: memref<1x8x256xf32, #tpu.memory_space<vmem>>, %arg7: memref<8x290xf32, #tpu.memory_space<vmem>>, %arg8: memref<8x290xf32, #tpu.memory_space<vmem>>) attributes {dimension_semantics = [#tpu.dimension_semantics<parallel>], iteration_bounds = array<i64: 2>, scalar_prefetch = 0 : i64, scratch_operands = 2 : i64, tpu.core_type = #tpu.core_type<tc>, window_params = [{transform_indices = @transform_0, window_bounds = array<i64: 1, 8, 256>}, {pipeline_mode = #tpu.pipeline_mode<synchronous>, transform_indices = @transform_1, window_bounds = array<i64: 8, 72>}, {pipeline_mode = #tpu.pipeline_mode<synchronous>, transform_indices = @transform_2, window_bounds = array<i64: 8, 72>}, {pipeline_mode = #tpu.pipeline_mode<synchronous>, transform_indices = @transform_3, window_bounds = array<i64: 8, 1>}, {pipeline_mode = #tpu.pipeline_mode<synchronous>, transform_indices = @transform_4, window_bounds = array<i64: 8, 8>}, {transform_indices = @transform_5, window_bounds = array<i64: 1, 8, 256>}]} {
    %c0 = arith.constant 0 : index
    %c0_0 = arith.constant 0 : index
    %c0_1 = arith.constant 0 : index
    %0 = vector.load %arg1[%c0, %c0_0, %c0_1] : memref<1x8x256xbf16, #tpu.memory_space<vmem>>, vector<1x8x256xbf16>
    %1 = vector.shape_cast %0 : vector<1x8x256xbf16> to vector<8x256xbf16>
    %2 = arith.extf %1 : vector<8x256xbf16> to vector<8x256xf32>
    %cst = arith.constant 0.000000e+00 : f32
    %3 = vector.broadcast %cst : f32 to vector<8x17xf32>
    %c0_2 = arith.constant 0 : index
    %c0_3 = arith.constant 0 : index
    %4 = vector.load %arg7[%c0_2, %c0_3] : memref<8x290xf32, #tpu.memory_space<vmem>>, vector<8x17xf32>
    tpu.vector_store %arg7[%c0_2, %c0_3], %3 {strides = array<i32>} : memref<8x290xf32, #tpu.memory_space<vmem>>, vector<8x17xf32>,
    %cst_4 = arith.constant 0.000000e+00 : f32
    %5 = vector.broadcast %cst_4 : f32 to vector<8x17xf32>
    %c0_5 = arith.constant 0 : index
    %c273 = arith.constant 273 : index
    %6 = vector.load %arg7[%c0_5, %c273] : memref<8x290xf32, #tpu.memory_space<vmem>>, vector<8x17xf32>
    tpu.vector_store %arg7[%c0_5, %c273], %5 {strides = array<i32>} : memref<8x290xf32, #tpu.memory_space<vmem>>, vector<8x17xf32>,
    %c0_6 = arith.constant 0 : index
    %c17 = arith.constant 17 : index
    %7 = vector.load %arg7[%c0_6, %c17] : memref<8x290xf32, #tpu.memory_space<vmem>>, vector<8x256xf32>
    tpu.vector_store %arg7[%c0_6, %c17], %2 {strides = array<i32>} : memref<8x290xf32, #tpu.memory_space<vmem>>, vector<8x256xf32>,
    %8 = tpu.iota {dimensions = array<i32: 1>} : vector<1x256xi32>
    %c16_i32 = arith.constant 16 : i32
    %c0_i32 = arith.constant 0 : i32
    %9 = arith.cmpi eq, %c16_i32, %c0_i32 : i32
    %c1_i32 = arith.constant 1 : i32
    %10 = arith.select %9, %c1_i32, %c16_i32 : i32
    %11 = vector.broadcast %10 : i32 to vector<1x256xi32>
    %12 = arith.remsi %8, %11 : vector<1x256xi32>
    %c0_i32_7 = arith.constant 0 : i32
    %13 = vector.broadcast %c0_i32_7 : i32 to vector<1x256xi32>
    %14 = arith.cmpi ne, %12, %13 : vector<1x256xi32>
    %c0_i32_8 = arith.constant 0 : i32
    %15 = vector.broadcast %c0_i32_8 : i32 to vector<1x256xi32>
    %16 = arith.cmpi slt, %12, %15 : vector<1x256xi32>
    %c0_i32_9 = arith.constant 0 : i32
    %17 = arith.cmpi slt, %10, %c0_i32_9 : i32
    %18 = vector.broadcast %17 : i1 to vector<1x256xi1>
    %19 = vector.broadcast %18 : vector<1x256xi1> to vector<1x256xi1>
    %20 = arith.xori %16, %19 : vector<1x256xi1>
    %21 = arith.andi %20, %14 : vector<1x256xi1>
    %22 = vector.broadcast %10 : i32 to vector<1x256xi32>
    %23 = arith.addi %12, %22 : vector<1x256xi32>
    %24 = arith.select %21, %23, %12 : vector<1x256xi1>, vector<1x256xi32>
    %c0_10 = arith.constant 0 : index
    %c0_11 = arith.constant 0 : index
    %25 = vector.load %arg7[%c0_10, %c0_11] : memref<8x290xf32, #tpu.memory_space<vmem>>, vector<8x256xf32>
    %c-1_i32 = arith.constant -1 : i32
    %26 = vector.broadcast %c-1_i32 : i32 to vector<1x256xi32>
    %27 = arith.addi %24, %26 : vector<1x256xi32>
    %c0_i32_12 = arith.constant 0 : i32
    %28 = vector.broadcast %c0_i32_12 : i32 to vector<1x256xi32>
    %29 = arith.cmpi sge, %27, %28 : vector<1x256xi32>
    %c-1_i32_13 = arith.constant -1 : i32
    %30 = vector.broadcast %c-1_i32_13 : i32 to vector<1x256xi32>
    %31 = arith.addi %24, %30 : vector<1x256xi32>
    %c16_i32_14 = arith.constant 16 : i32
    %32 = vector.broadcast %c16_i32_14 : i32 to vector<1x256xi32>
    %33 = arith.cmpi slt, %31, %32 : vector<1x256xi32>
    %34 = arith.andi %29, %33 : vector<1x256xi1>
    %cst_15 = arith.constant 0.000000e+00 : f32
    %35 = vector.broadcast %cst_15 : f32 to vector<8x256xf32>
    %36 = vector.shape_cast %34 : vector<1x256xi1> to vector<1x256xi1>
    %37 = vector.broadcast %36 : vector<1x256xi1> to vector<8x256xi1>
    %38 = arith.select %37, %25, %35 : vector<8x256xi1>, vector<8x256xf32>
    %c0_16 = arith.constant 0 : index
    %c1 = arith.constant 1 : index
    %39 = vector.load %arg7[%c0_16, %c1] : memref<8x290xf32, #tpu.memory_space<vmem>>, vector<8x256xf32>
    %c0_17 = arith.constant 0 : index
    %c2 = arith.constant 2 : index
    %40 = vector.load %arg7[%c0_17, %c2] : memref<8x290xf32, #tpu.memory_space<vmem>>, vector<8x256xf32>
    %c1_i32_18 = arith.constant 1 : i32
    %41 = vector.broadcast %c1_i32_18 : i32 to vector<1x256xi32>
    %42 = arith.addi %24, %41 : vector<1x256xi32>
    %c0_i32_19 = arith.constant 0 : i32
    %43 = vector.broadcast %c0_i32_19 : i32 to vector<1x256xi32>
    %44 = arith.cmpi sge, %42, %43 : vector<1x256xi32>
    %c1_i32_20 = arith.constant 1 : i32
    %45 = vector.broadcast %c1_i32_20 : i32 to vector<1x256xi32>
    %46 = arith.addi %24, %45 : vector<1x256xi32>
    %c16_i32_21 = arith.constant 16 : i32
    %47 = vector.broadcast %c16_i32_21 : i32 to vector<1x256xi32>
    %48 = arith.cmpi slt, %46, %47 : vector<1x256xi32>
    %49 = arith.andi %44, %48 : vector<1x256xi1>
    %cst_22 = arith.constant 0.000000e+00 : f32
    %50 = vector.broadcast %cst_22 : f32 to vector<8x256xf32>
    %51 = vector.shape_cast %49 : vector<1x256xi1> to vector<1x256xi1>
    %52 = vector.broadcast %51 : vector<1x256xi1> to vector<8x256xi1>
    %53 = arith.select %52, %40, %50 : vector<8x256xi1>, vector<8x256xf32>
    %c0_23 = arith.constant 0 : index
    %c16 = arith.constant 16 : index
    %54 = vector.load %arg7[%c0_23, %c16] : memref<8x290xf32, #tpu.memory_space<vmem>>, vector<8x256xf32>
    %c-1_i32_24 = arith.constant -1 : i32
    %55 = vector.broadcast %c-1_i32_24 : i32 to vector<1x256xi32>
    %56 = arith.addi %24, %55 : vector<1x256xi32>
    %c0_i32_25 = arith.constant 0 : i32
    %57 = vector.broadcast %c0_i32_25 : i32 to vector<1x256xi32>
    %58 = arith.cmpi sge, %56, %57 : vector<1x256xi32>
    %c-1_i32_26 = arith.constant -1 : i32
    %59 = vector.broadcast %c-1_i32_26 : i32 to vector<1x256xi32>
    %60 = arith.addi %24, %59 : vector<1x256xi32>
    %c16_i32_27 = arith.constant 16 : i32
    %61 = vector.broadcast %c16_i32_27 : i32 to vector<1x256xi32>
    %62 = arith.cmpi slt, %60, %61 : vector<1x256xi32>
    %63 = arith.andi %58, %62 : vector<1x256xi1>
    %cst_28 = arith.constant 0.000000e+00 : f32
    %64 = vector.broadcast %cst_28 : f32 to vector<8x256xf32>
    %65 = vector.shape_cast %63 : vector<1x256xi1> to vector<1x256xi1>
    %66 = vector.broadcast %65 : vector<1x256xi1> to vector<8x256xi1>
    %67 = arith.select %66, %54, %64 : vector<8x256xi1>, vector<8x256xf32>
    %c0_29 = arith.constant 0 : index
    %c17_30 = arith.constant 17 : index
    %68 = vector.load %arg7[%c0_29, %c17_30] : memref<8x290xf32, #tpu.memory_space<vmem>>, vector<8x256xf32>
    %c0_31 = arith.constant 0 : index
    %c18 = arith.constant 18 : index
    %69 = vector.load %arg7[%c0_31, %c18] : memref<8x290xf32, #tpu.memory_space<vmem>>, vector<8x256xf32>
    %c1_i32_32 = arith.constant 1 : i32
    %70 = vector.broadcast %c1_i32_32 : i32 to vector<1x256xi32>
    %71 = arith.addi %24, %70 : vector<1x256xi32>
    %c0_i32_33 = arith.constant 0 : i32
    %72 = vector.broadcast %c0_i32_33 : i32 to vector<1x256xi32>
    %73 = arith.cmpi sge, %71, %72 : vector<1x256xi32>
    %c1_i32_34 = arith.constant 1 : i32
    %74 = vector.broadcast %c1_i32_34 : i32 to vector<1x256xi32>
    %75 = arith.addi %24, %74 : vector<1x256xi32>
    %c16_i32_35 = arith.constant 16 : i32
    %76 = vector.broadcast %c16_i32_35 : i32 to vector<1x256xi32>
    %77 = arith.cmpi slt, %75, %76 : vector<1x256xi32>
    %78 = arith.andi %73, %77 : vector<1x256xi1>
    %cst_36 = arith.constant 0.000000e+00 : f32
    %79 = vector.broadcast %cst_36 : f32 to vector<8x256xf32>
    %80 = vector.shape_cast %78 : vector<1x256xi1> to vector<1x256xi1>
    %81 = vector.broadcast %80 : vector<1x256xi1> to vector<8x256xi1>
    %82 = arith.select %81, %69, %79 : vector<8x256xi1>, vector<8x256xf32>
    %c0_37 = arith.constant 0 : index
    %c32 = arith.constant 32 : index
    %83 = vector.load %arg7[%c0_37, %c32] : memref<8x290xf32, #tpu.memory_space<vmem>>, vector<8x256xf32>
    %c-1_i32_38 = arith.constant -1 : i32
    %84 = vector.broadcast %c-1_i32_38 : i32 to vector<1x256xi32>
    %85 = arith.addi %24, %84 : vector<1x256xi32>
    %c0_i32_39 = arith.constant 0 : i32
    %86 = vector.broadcast %c0_i32_39 : i32 to vector<1x256xi32>
    %87 = arith.cmpi sge, %85, %86 : vector<1x256xi32>
    %c-1_i32_40 = arith.constant -1 : i32
    %88 = vector.broadcast %c-1_i32_40 : i32 to vector<1x256xi32>
    %89 = arith.addi %24, %88 : vector<1x256xi32>
    %c16_i32_41 = arith.constant 16 : i32
    %90 = vector.broadcast %c16_i32_41 : i32 to vector<1x256xi32>
    %91 = arith.cmpi slt, %89, %90 : vector<1x256xi32>
    %92 = arith.andi %87, %91 : vector<1x256xi1>
    %cst_42 = arith.constant 0.000000e+00 : f32
    %93 = vector.broadcast %cst_42 : f32 to vector<8x256xf32>
    %94 = vector.shape_cast %92 : vector<1x256xi1> to vector<1x256xi1>
    %95 = vector.broadcast %94 : vector<1x256xi1> to vector<8x256xi1>
    %96 = arith.select %95, %83, %93 : vector<8x256xi1>, vector<8x256xf32>
    %c0_43 = arith.constant 0 : index
    %c33 = arith.constant 33 : index
    %97 = vector.load %arg7[%c0_43, %c33] : memref<8x290xf32, #tpu.memory_space<vmem>>, vector<8x256xf32>
    %c0_44 = arith.constant 0 : index
    %c34 = arith.constant 34 : index
    %98 = vector.load %arg7[%c0_44, %c34] : memref<8x290xf32, #tpu.memory_space<vmem>>, vector<8x256xf32>
    %c1_i32_45 = arith.constant 1 : i32
    %99 = vector.broadcast %c1_i32_45 : i32 to vector<1x256xi32>
    %100 = arith.addi %24, %99 : vector<1x256xi32>
    %c0_i32_46 = arith.constant 0 : i32
    %101 = vector.broadcast %c0_i32_46 : i32 to vector<1x256xi32>
    %102 = arith.cmpi sge, %100, %101 : vector<1x256xi32>
    %c1_i32_47 = arith.constant 1 : i32
    %103 = vector.broadcast %c1_i32_47 : i32 to vector<1x256xi32>
    %104 = arith.addi %24, %103 : vector<1x256xi32>
    %c16_i32_48 = arith.constant 16 : i32
    %105 = vector.broadcast %c16_i32_48 : i32 to vector<1x256xi32>
    %106 = arith.cmpi slt, %104, %105 : vector<1x256xi32>
    %107 = arith.andi %102, %106 : vector<1x256xi1>
    %cst_49 = arith.constant 0.000000e+00 : f32
    %108 = vector.broadcast %cst_49 : f32 to vector<8x256xf32>
    %109 = vector.shape_cast %107 : vector<1x256xi1> to vector<1x256xi1>
    %110 = vector.broadcast %109 : vector<1x256xi1> to vector<8x256xi1>
    %111 = arith.select %110, %98, %108 : vector<8x256xi1>, vector<8x256xf32>
    %112 = tpu.concatenate %38, %39, %53, %67, %68, %82, %96, %97, %111 in 0 : vector<8x256xf32>, vector<8x256xf32>, vector<8x256xf32>, vector<8x256xf32>, vector<8x256xf32>, vector<8x256xf32>, vector<8x256xf32>, vector<8x256xf32>, vector<8x256xf32> -> vector<72x256xf32>
    %113 = arith.truncf %112 : vector<72x256xf32> to vector<72x256xbf16>
    %c0_50 = arith.constant 0 : index
    %c0_51 = arith.constant 0 : index
    %114 = vector.load %arg2[%c0_50, %c0_51] : memref<8x72xbf16, #tpu.memory_space<vmem>>, vector<8x72xbf16>
    %cst_52 = arith.constant dense<0.000000e+00> : vector<8x256xf32>
    %115 = tpu.matmul %114, %113, %cst_52 {dimension_numbers = #tpu.dot_dimension_numbers<[1], [0], [0], [1], [0, 0, 1, 1], [], []>} : vector<8x72xbf16>, vector<72x256xbf16>, vector<8x256xf32> -> vector<8x256xf32>
    %cst_53 = arith.constant dense<0.000000e+00> : vector<8xf32>
    %116 = vector.multi_reduction <add>, %115, %cst_53 [1] : vector<8x256xf32> to vector<8xf32>
    %117 = vector.shape_cast %116 : vector<8xf32> to vector<8x1xf32>
    %cst_54 = arith.constant 2.560000e+02 : f32
    %118 = vector.broadcast %cst_54 : f32 to vector<8x1xf32>
    %119 = arith.divf %117, %118 : vector<8x1xf32>
    %120 = vector.broadcast %119 : vector<8x1xf32> to vector<8x256xf32>
    %121 = arith.subf %115, %120 : vector<8x256xf32>
    %122 = arith.mulf %121, %121 : vector<8x256xf32>
    %cst_55 = arith.constant dense<0.000000e+00> : vector<8xf32>
    %123 = vector.multi_reduction <add>, %122, %cst_55 [1] : vector<8x256xf32> to vector<8xf32>
    %124 = vector.shape_cast %123 : vector<8xf32> to vector<8x1xf32>
    %cst_56 = arith.constant 2.560000e+02 : f32
    %125 = vector.broadcast %cst_56 : f32 to vector<8x1xf32>
    %126 = arith.divf %124, %125 : vector<8x1xf32>
    %127 = vector.broadcast %119 : vector<8x1xf32> to vector<8x256xf32>
    %128 = arith.subf %115, %127 : vector<8x256xf32>
    %cst_57 = arith.constant 9.99999974E-6 : f32
    %129 = vector.broadcast %cst_57 : f32 to vector<8x1xf32>
    %130 = arith.addf %126, %129 : vector<8x1xf32>
    %131 = math.rsqrt %130 : vector<8x1xf32>
    %132 = vector.broadcast %131 : vector<8x1xf32> to vector<8x256xf32>
    %133 = arith.mulf %128, %132 : vector<8x256xf32>
    %cst_58 = arith.constant 0.000000e+00 : f32
    %134 = vector.broadcast %cst_58 : f32 to vector<8x256xf32>
    %135 = arith.cmpf oge, %133, %134 : vector<8x256xf32>
    %cst_59 = arith.constant 2.000000e-01 : f32
    %136 = vector.broadcast %cst_59 : f32 to vector<8x256xf32>
    %137 = arith.mulf %136, %133 : vector<8x256xf32>
    %138 = arith.select %135, %133, %137 : vector<8x256xi1>, vector<8x256xf32>
    %cst_60 = arith.constant 0.000000e+00 : f32
    %139 = vector.broadcast %cst_60 : f32 to vector<8x17xf32>
    %c0_61 = arith.constant 0 : index
    %c0_62 = arith.constant 0 : index
    %140 = vector.load %arg8[%c0_61, %c0_62] : memref<8x290xf32, #tpu.memory_space<vmem>>, vector<8x17xf32>
    tpu.vector_store %arg8[%c0_61, %c0_62], %139 {strides = array<i32>} : memref<8x290xf32, #tpu.memory_space<vmem>>, vector<8x17xf32>,
    %cst_63 = arith.constant 0.000000e+00 : f32
    %141 = vector.broadcast %cst_63 : f32 to vector<8x17xf32>
    %c0_64 = arith.constant 0 : index
    %c273_65 = arith.constant 273 : index
    %142 = vector.load %arg8[%c0_64, %c273_65] : memref<8x290xf32, #tpu.memory_space<vmem>>, vector<8x17xf32>
    tpu.vector_store %arg8[%c0_64, %c273_65], %141 {strides = array<i32>} : memref<8x290xf32, #tpu.memory_space<vmem>>, vector<8x17xf32>,
    %c0_66 = arith.constant 0 : index
    %c17_67 = arith.constant 17 : index
    %143 = vector.load %arg8[%c0_66, %c17_67] : memref<8x290xf32, #tpu.memory_space<vmem>>, vector<8x256xf32>
    tpu.vector_store %arg8[%c0_66, %c17_67], %138 {strides = array<i32>} : memref<8x290xf32, #tpu.memory_space<vmem>>, vector<8x256xf32>,
    %144 = tpu.iota {dimensions = array<i32: 1>} : vector<1x256xi32>
    %c16_i32_68 = arith.constant 16 : i32
    %c0_i32_69 = arith.constant 0 : i32
    %145 = arith.cmpi eq, %c16_i32_68, %c0_i32_69 : i32
    %c1_i32_70 = arith.constant 1 : i32
    %146 = arith.select %145, %c1_i32_70, %c16_i32_68 : i32
    %147 = vector.broadcast %146 : i32 to vector<1x256xi32>
    %148 = arith.remsi %144, %147 : vector<1x256xi32>
    %c0_i32_71 = arith.constant 0 : i32
    %149 = vector.broadcast %c0_i32_71 : i32 to vector<1x256xi32>
    %150 = arith.cmpi ne, %148, %149 : vector<1x256xi32>
    %c0_i32_72 = arith.constant 0 : i32
    %151 = vector.broadcast %c0_i32_72 : i32 to vector<1x256xi32>
    %152 = arith.cmpi slt, %148, %151 : vector<1x256xi32>
    %c0_i32_73 = arith.constant 0 : i32
    %153 = arith.cmpi slt, %146, %c0_i32_73 : i32
    %154 = vector.broadcast %153 : i1 to vector<1x256xi1>
    %155 = vector.broadcast %154 : vector<1x256xi1> to vector<1x256xi1>
    %156 = arith.xori %152, %155 : vector<1x256xi1>
    %157 = arith.andi %156, %150 : vector<1x256xi1>
    %158 = vector.broadcast %146 : i32 to vector<1x256xi32>
    %159 = arith.addi %148, %158 : vector<1x256xi32>
    %160 = arith.select %157, %159, %148 : vector<1x256xi1>, vector<1x256xi32>
    %c0_74 = arith.constant 0 : index
    %c0_75 = arith.constant 0 : index
    %161 = vector.load %arg8[%c0_74, %c0_75] : memref<8x290xf32, #tpu.memory_space<vmem>>, vector<8x256xf32>
    %c-1_i32_76 = arith.constant -1 : i32
    %162 = vector.broadcast %c-1_i32_76 : i32 to vector<1x256xi32>
    %163 = arith.addi %160, %162 : vector<1x256xi32>
    %c0_i32_77 = arith.constant 0 : i32
    %164 = vector.broadcast %c0_i32_77 : i32 to vector<1x256xi32>
    %165 = arith.cmpi sge, %163, %164 : vector<1x256xi32>
    %c-1_i32_78 = arith.constant -1 : i32
    %166 = vector.broadcast %c-1_i32_78 : i32 to vector<1x256xi32>
    %167 = arith.addi %160, %166 : vector<1x256xi32>
    %c16_i32_79 = arith.constant 16 : i32
    %168 = vector.broadcast %c16_i32_79 : i32 to vector<1x256xi32>
    %169 = arith.cmpi slt, %167, %168 : vector<1x256xi32>
    %170 = arith.andi %165, %169 : vector<1x256xi1>
    %cst_80 = arith.constant 0.000000e+00 : f32
    %171 = vector.broadcast %cst_80 : f32 to vector<8x256xf32>
    %172 = vector.shape_cast %170 : vector<1x256xi1> to vector<1x256xi1>
    %173 = vector.broadcast %172 : vector<1x256xi1> to vector<8x256xi1>
    %174 = arith.select %173, %161, %171 : vector<8x256xi1>, vector<8x256xf32>
    %c0_81 = arith.constant 0 : index
    %c1_82 = arith.constant 1 : index
    %175 = vector.load %arg8[%c0_81, %c1_82] : memref<8x290xf32, #tpu.memory_space<vmem>>, vector<8x256xf32>
    %c0_83 = arith.constant 0 : index
    %c2_84 = arith.constant 2 : index
    %176 = vector.load %arg8[%c0_83, %c2_84] : memref<8x290xf32, #tpu.memory_space<vmem>>, vector<8x256xf32>
    %c1_i32_85 = arith.constant 1 : i32
    %177 = vector.broadcast %c1_i32_85 : i32 to vector<1x256xi32>
    %178 = arith.addi %160, %177 : vector<1x256xi32>
    %c0_i32_86 = arith.constant 0 : i32
    %179 = vector.broadcast %c0_i32_86 : i32 to vector<1x256xi32>
    %180 = arith.cmpi sge, %178, %179 : vector<1x256xi32>
    %c1_i32_87 = arith.constant 1 : i32
    %181 = vector.broadcast %c1_i32_87 : i32 to vector<1x256xi32>
    %182 = arith.addi %160, %181 : vector<1x256xi32>
    %c16_i32_88 = arith.constant 16 : i32
    %183 = vector.broadcast %c16_i32_88 : i32 to vector<1x256xi32>
    %184 = arith.cmpi slt, %182, %183 : vector<1x256xi32>
    %185 = arith.andi %180, %184 : vector<1x256xi1>
    %cst_89 = arith.constant 0.000000e+00 : f32
    %186 = vector.broadcast %cst_89 : f32 to vector<8x256xf32>
    %187 = vector.shape_cast %185 : vector<1x256xi1> to vector<1x256xi1>
    %188 = vector.broadcast %187 : vector<1x256xi1> to vector<8x256xi1>
    %189 = arith.select %188, %176, %186 : vector<8x256xi1>, vector<8x256xf32>
    %c0_90 = arith.constant 0 : index
    %c16_91 = arith.constant 16 : index
    %190 = vector.load %arg8[%c0_90, %c16_91] : memref<8x290xf32, #tpu.memory_space<vmem>>, vector<8x256xf32>
    %c-1_i32_92 = arith.constant -1 : i32
    %191 = vector.broadcast %c-1_i32_92 : i32 to vector<1x256xi32>
    %192 = arith.addi %160, %191 : vector<1x256xi32>
    %c0_i32_93 = arith.constant 0 : i32
    %193 = vector.broadcast %c0_i32_93 : i32 to vector<1x256xi32>
    %194 = arith.cmpi sge, %192, %193 : vector<1x256xi32>
    %c-1_i32_94 = arith.constant -1 : i32
    %195 = vector.broadcast %c-1_i32_94 : i32 to vector<1x256xi32>
    %196 = arith.addi %160, %195 : vector<1x256xi32>
    %c16_i32_95 = arith.constant 16 : i32
    %197 = vector.broadcast %c16_i32_95 : i32 to vector<1x256xi32>
    %198 = arith.cmpi slt, %196, %197 : vector<1x256xi32>
    %199 = arith.andi %194, %198 : vector<1x256xi1>
    %cst_96 = arith.constant 0.000000e+00 : f32
    %200 = vector.broadcast %cst_96 : f32 to vector<8x256xf32>
    %201 = vector.shape_cast %199 : vector<1x256xi1> to vector<1x256xi1>
    %202 = vector.broadcast %201 : vector<1x256xi1> to vector<8x256xi1>
    %203 = arith.select %202, %190, %200 : vector<8x256xi1>, vector<8x256xf32>
    %c0_97 = arith.constant 0 : index
    %c17_98 = arith.constant 17 : index
    %204 = vector.load %arg8[%c0_97, %c17_98] : memref<8x290xf32, #tpu.memory_space<vmem>>, vector<8x256xf32>
    %c0_99 = arith.constant 0 : index
    %c18_100 = arith.constant 18 : index
    %205 = vector.load %arg8[%c0_99, %c18_100] : memref<8x290xf32, #tpu.memory_space<vmem>>, vector<8x256xf32>
    %c1_i32_101 = arith.constant 1 : i32
    %206 = vector.broadcast %c1_i32_101 : i32 to vector<1x256xi32>
    %207 = arith.addi %160, %206 : vector<1x256xi32>
    %c0_i32_102 = arith.constant 0 : i32
    %208 = vector.broadcast %c0_i32_102 : i32 to vector<1x256xi32>
    %209 = arith.cmpi sge, %207, %208 : vector<1x256xi32>
    %c1_i32_103 = arith.constant 1 : i32
    %210 = vector.broadcast %c1_i32_103 : i32 to vector<1x256xi32>
    %211 = arith.addi %160, %210 : vector<1x256xi32>
    %c16_i32_104 = arith.constant 16 : i32
    %212 = vector.broadcast %c16_i32_104 : i32 to vector<1x256xi32>
    %213 = arith.cmpi slt, %211, %212 : vector<1x256xi32>
    %214 = arith.andi %209, %213 : vector<1x256xi1>
    %cst_105 = arith.constant 0.000000e+00 : f32
    %215 = vector.broadcast %cst_105 : f32 to vector<8x256xf32>
    %216 = vector.shape_cast %214 : vector<1x256xi1> to vector<1x256xi1>
    %217 = vector.broadcast %216 : vector<1x256xi1> to vector<8x256xi1>
    %218 = arith.select %217, %205, %215 : vector<8x256xi1>, vector<8x256xf32>
    %c0_106 = arith.constant 0 : index
    %c32_107 = arith.constant 32 : index
    %219 = vector.load %arg8[%c0_106, %c32_107] : memref<8x290xf32, #tpu.memory_space<vmem>>, vector<8x256xf32>
    %c-1_i32_108 = arith.constant -1 : i32
    %220 = vector.broadcast %c-1_i32_108 : i32 to vector<1x256xi32>
    %221 = arith.addi %160, %220 : vector<1x256xi32>
    %c0_i32_109 = arith.constant 0 : i32
    %222 = vector.broadcast %c0_i32_109 : i32 to vector<1x256xi32>
    %223 = arith.cmpi sge, %221, %222 : vector<1x256xi32>
    %c-1_i32_110 = arith.constant -1 : i32
    %224 = vector.broadcast %c-1_i32_110 : i32 to vector<1x256xi32>
    %225 = arith.addi %160, %224 : vector<1x256xi32>
    %c16_i32_111 = arith.constant 16 : i32
    %226 = vector.broadcast %c16_i32_111 : i32 to vector<1x256xi32>
    %227 = arith.cmpi slt, %225, %226 : vector<1x256xi32>
    %228 = arith.andi %223, %227 : vector<1x256xi1>
    %cst_112 = arith.constant 0.000000e+00 : f32
    %229 = vector.broadcast %cst_112 : f32 to vector<8x256xf32>
    %230 = vector.shape_cast %228 : vector<1x256xi1> to vector<1x256xi1>
    %231 = vector.broadcast %230 : vector<1x256xi1> to vector<8x256xi1>
    %232 = arith.select %231, %219, %229 : vector<8x256xi1>, vector<8x256xf32>
    %c0_113 = arith.constant 0 : index
    %c33_114 = arith.constant 33 : index
    %233 = vector.load %arg8[%c0_113, %c33_114] : memref<8x290xf32, #tpu.memory_space<vmem>>, vector<8x256xf32>
    %c0_115 = arith.constant 0 : index
    %c34_116 = arith.constant 34 : index
    %234 = vector.load %arg8[%c0_115, %c34_116] : memref<8x290xf32, #tpu.memory_space<vmem>>, vector<8x256xf32>
    %c1_i32_117 = arith.constant 1 : i32
    %235 = vector.broadcast %c1_i32_117 : i32 to vector<1x256xi32>
    %236 = arith.addi %160, %235 : vector<1x256xi32>
    %c0_i32_118 = arith.constant 0 : i32
    %237 = vector.broadcast %c0_i32_118 : i32 to vector<1x256xi32>
    %238 = arith.cmpi sge, %236, %237 : vector<1x256xi32>
    %c1_i32_119 = arith.constant 1 : i32
    %239 = vector.broadcast %c1_i32_119 : i32 to vector<1x256xi32>
    %240 = arith.addi %160, %239 : vector<1x256xi32>
    %c16_i32_120 = arith.constant 16 : i32
    %241 = vector.broadcast %c16_i32_120 : i32 to vector<1x256xi32>
    %242 = arith.cmpi slt, %240, %241 : vector<1x256xi32>
    %243 = arith.andi %238, %242 : vector<1x256xi1>
    %cst_121 = arith.constant 0.000000e+00 : f32
    %244 = vector.broadcast %cst_121 : f32 to vector<8x256xf32>
    %245 = vector.shape_cast %243 : vector<1x256xi1> to vector<1x256xi1>
    %246 = vector.broadcast %245 : vector<1x256xi1> to vector<8x256xi1>
    %247 = arith.select %246, %234, %244 : vector<8x256xi1>, vector<8x256xf32>
    %248 = tpu.concatenate %174, %175, %189, %203, %204, %218, %232, %233, %247 in 0 : vector<8x256xf32>, vector<8x256xf32>, vector<8x256xf32>, vector<8x256xf32>, vector<8x256xf32>, vector<8x256xf32>, vector<8x256xf32>, vector<8x256xf32>, vector<8x256xf32> -> vector<72x256xf32>
    %249 = arith.truncf %248 : vector<72x256xf32> to vector<72x256xbf16>
    %c0_122 = arith.constant 0 : index
    %c0_123 = arith.constant 0 : index
    %250 = vector.load %arg3[%c0_122, %c0_123] : memref<8x72xbf16, #tpu.memory_space<vmem>>, vector<8x72xbf16>
    %cst_124 = arith.constant dense<0.000000e+00> : vector<8x256xf32>
    %251 = tpu.matmul %250, %249, %cst_124 {dimension_numbers = #tpu.dot_dimension_numbers<[1], [0], [0], [1], [0, 0, 1, 1], [], []>} : vector<8x72xbf16>, vector<72x256xbf16>, vector<8x256xf32> -> vector<8x256xf32>
    %cst_125 = arith.constant dense<0.000000e+00> : vector<8xf32>
    %252 = vector.multi_reduction <add>, %251, %cst_125 [1] : vector<8x256xf32> to vector<8xf32>
    %253 = vector.shape_cast %252 : vector<8xf32> to vector<8x1xf32>
    %cst_126 = arith.constant 2.560000e+02 : f32
    %254 = vector.broadcast %cst_126 : f32 to vector<8x1xf32>
    %255 = arith.divf %253, %254 : vector<8x1xf32>
    %256 = vector.broadcast %255 : vector<8x1xf32> to vector<8x256xf32>
    %257 = arith.subf %251, %256 : vector<8x256xf32>
    %258 = arith.mulf %257, %257 : vector<8x256xf32>
    %cst_127 = arith.constant dense<0.000000e+00> : vector<8xf32>
    %259 = vector.multi_reduction <add>, %258, %cst_127 [1] : vector<8x256xf32> to vector<8xf32>
    %260 = vector.shape_cast %259 : vector<8xf32> to vector<8x1xf32>
    %cst_128 = arith.constant 2.560000e+02 : f32
    %261 = vector.broadcast %cst_128 : f32 to vector<8x1xf32>
    %262 = arith.divf %260, %261 : vector<8x1xf32>
    %263 = vector.broadcast %255 : vector<8x1xf32> to vector<8x256xf32>
    %264 = arith.subf %251, %263 : vector<8x256xf32>
    %cst_129 = arith.constant 9.99999974E-6 : f32
    %265 = vector.broadcast %cst_129 : f32 to vector<8x1xf32>
    %266 = arith.addf %262, %265 : vector<8x1xf32>
    %267 = math.rsqrt %266 : vector<8x1xf32>
    %268 = vector.broadcast %267 : vector<8x1xf32> to vector<8x256xf32>
    %269 = arith.mulf %264, %268 : vector<8x256xf32>
    %cst_130 = arith.constant 0.000000e+00 : f32
    %270 = vector.broadcast %cst_130 : f32 to vector<8x256xf32>
    %271 = arith.cmpf oge, %269, %270 : vector<8x256xf32>
    %cst_131 = arith.constant 2.000000e-01 : f32
    %272 = vector.broadcast %cst_131 : f32 to vector<8x256xf32>
    %273 = arith.mulf %272, %269 : vector<8x256xf32>
    %274 = arith.select %271, %269, %273 : vector<8x256xi1>, vector<8x256xf32>
    %c0_132 = arith.constant 0 : index
    %c0_133 = arith.constant 0 : index
    %275 = vector.load %arg4[%c0_132, %c0_133] : memref<8x1xf32, #tpu.memory_space<vmem>>, vector<8x1xf32>
    %276 = vector.broadcast %275 : vector<8x1xf32> to vector<8x256xf32>
    %277 = arith.mulf %274, %276 : vector<8x256xf32>
    %cst_134 = arith.constant dense<0.000000e+00> : vector<256xf32>
    %278 = vector.multi_reduction <add>, %277, %cst_134 [0] : vector<8x256xf32> to vector<256xf32>
    %279 = vector.shape_cast %278 : vector<256xf32> to vector<1x256xf32>
    %280 = arith.negf %279 : vector<1x256xf32>
    %281 = math.exp %280 : vector<1x256xf32>
    %cst_135 = arith.constant 1.000000e+00 : f32
    %282 = vector.broadcast %cst_135 : f32 to vector<1x256xf32>
    %283 = arith.addf %282, %281 : vector<1x256xf32>
    %284 = arith.divf %282, %283 : vector<1x256xf32>
    %285 = vector.broadcast %284 : vector<1x256xf32> to vector<8x256xf32>
    %286 = arith.mulf %285, %274 : vector<8x256xf32>
    %287 = math.absf %274 : vector<8x256xf32>
    %cst_136 = arith.constant dense<0.000000e+00> : vector<8xf32>
    %288 = vector.multi_reduction <add>, %287, %cst_136 [1] : vector<8x256xf32> to vector<8xf32>
    %289 = vector.shape_cast %288 : vector<8xf32> to vector<8x1xf32>
    %c0_137 = arith.constant 0 : index
    %c0_138 = arith.constant 0 : index
    %290 = vector.load %arg5[%c0_137, %c0_138] : memref<8x8xf32, #tpu.memory_space<vmem>>, vector<8x8xf32>
    %cst_139 = arith.constant dense<0.000000e+00> : vector<8x1xf32>
    %291 = tpu.matmul %290, %289, %cst_139 {dimension_numbers = #tpu.dot_dimension_numbers<[1], [0], [0], [1], [0, 0, 1, 1], [], []>} : vector<8x8xf32>, vector<8x1xf32>, vector<8x1xf32> -> vector<8x1xf32>
    %292 = arith.negf %291 : vector<8x1xf32>
    %293 = math.exp %292 : vector<8x1xf32>
    %cst_140 = arith.constant 1.000000e+00 : f32
    %294 = vector.broadcast %cst_140 : f32 to vector<8x1xf32>
    %295 = arith.addf %294, %293 : vector<8x1xf32>
    %296 = arith.divf %294, %295 : vector<8x1xf32>
    %297 = vector.broadcast %296 : vector<8x1xf32> to vector<8x256xf32>
    %298 = arith.mulf %297, %274 : vector<8x256xf32>
    %299 = arith.maximumf %286, %298 : vector<8x256xf32>
    %c0_141 = arith.constant 0 : index
    %c0_142 = arith.constant 0 : index
    %c0_143 = arith.constant 0 : index
    %300 = vector.load %arg6[%c0_141, %c0_142, %c0_143] : memref<1x8x256xf32, #tpu.memory_space<vmem>>, vector<1x8x256xf32>
    %301 = vector.shape_cast %300 : vector<1x8x256xf32> to vector<8x256xf32>
    %302 = vector.shape_cast %299 : vector<8x256xf32> to vector<1x8x256xf32>
    tpu.vector_store %arg6[%c0_141, %c0_142, %c0_143], %302 {strides = array<i32>} : memref<1x8x256xf32, #tpu.memory_space<vmem>>, vector<1x8x256xf32>,
    return
  }
  func.func @transform_0(%arg0: i32) -> (i32, i32, i32) {
    %c0_i32 = arith.constant 0 : i32
    %c0_i32_0 = arith.constant 0 : i32
    %c0_i32_1 = arith.constant 0 : i32
    return %arg0, %c0_i32, %c0_i32_0 : i32, i32, i32
  }
  func.func @transform_1(%arg0: i32) -> (i32, i32) {
    %c0_i32 = arith.constant 0 : i32
    %c0_i32_0 = arith.constant 0 : i32
    %c0_i32_1 = arith.constant 0 : i32
    return %c0_i32, %c0_i32_0 : i32, i32
  }
  func.func @transform_2(%arg0: i32) -> (i32, i32) {
    %c0_i32 = arith.constant 0 : i32
    %c0_i32_0 = arith.constant 0 : i32
    %c0_i32_1 = arith.constant 0 : i32
    return %c0_i32, %c0_i32_0 : i32, i32
  }
  func.func @transform_3(%arg0: i32) -> (i32, i32) {
    %c0_i32 = arith.constant 0 : i32
    %c0_i32_0 = arith.constant 0 : i32
    %c0_i32_1 = arith.constant 0 : i32
    return %c0_i32, %c0_i32_0 : i32, i32
  }
  func.func @transform_4(%arg0: i32) -> (i32, i32) {
    %c0_i32 = arith.constant 0 : i32
    %c0_i32_0 = arith.constant 0 : i32
    %c0_i32_1 = arith.constant 0 : i32
    return %c0_i32, %c0_i32_0 : i32, i32
  }
  func.func @transform_5(%arg0: i32) -> (i32, i32, i32) {
    %c0_i32 = arith.constant 0 : i32
    %c0_i32_0 = arith.constant 0 : i32
    %c0_i32_1 = arith.constant 0 : i32
    return %arg0, %c0_i32, %c0_i32_0 : i32, i32, i32
  }
}

</mosaic_0001>

<llo_original>
// kernel: conv_block_forward.1
$region0: #{conv_block_forward.1}
  #allocation0 [shape = 'u32[]', space=smem, size = 0x4, offset = 0x4, fixed_abs, tag = 'smem constant byte address 0x4 - core index']
  #allocation1 [shape = 'u32[144,128]{1,0:T(1,128)}', space=vmem, size = 0x12000, scoped, tag = 'internal scratch']
  #allocation2 [shape = 'f32[8,290]{1,0:T(8,128)}', space=vmem, size = 0x3000, scoped, tag = 'scratch operand']
  #allocation3 [shape = 'f32[8,290]{1,0:T(8,128)}', space=vmem, size = 0x3000, scoped, tag = 'scratch operand']
  %s0 = inlined_call_operand.vmem [shape: bf16[2,8,256], index: 0, kind: input, shape index: {}]
  %s1 = inlined_call_operand.vmem [shape: bf16[8,72], index: 1, kind: input, shape index: {}]
  %s2 = inlined_call_operand.vmem [shape: bf16[8,72], index: 2, kind: input, shape index: {}]
  %s3 = inlined_call_operand.vmem [shape: f32[8,1], index: 3, kind: input, shape index: {}]
  %s4 = inlined_call_operand.vmem [shape: f32[8,8], index: 4, kind: input, shape index: {}]
  %s5 = inlined_call_operand.vmem [shape: f32[2,8,256], index: 5, kind: output, shape index: {}]
  %s6 = sld [smem:[#allocation0]]
  $region53: #{conv_block_forward.1} parent=0
    _
  %s8 = ssub.s32 1, %s6
  %s9 = scalar_select 0, %s8, %s6
  loop: start=0, step=1, limit=4
  $region2: #{conv_block_forward.1} parent=0 // loop_pre_header
    _
  $region3: #{conv_block_forward.1} parent=0 // loop_header
    %s11 = sphi 0, %s15
    %p12 = scmp.ge.s32.totalorder %s11, 4
    %s21 = sphi 0, %s23
    %s24 = sphi 0, %s21
    %s25 = sphi 0, %s24
    %s41 = sphi 0, %s25
    %s45 = sphi 0, %s45
    %s47 = sphi 0, %s45
    %s48 = sphi 0, %s47
    %s62 = sphi 0, %s48
    %s66 = sphi 0, %s66
    %s68 = sphi 0, %s66
    %s69 = sphi 0, %s68
    %s83 = sphi 0, %s69
    %s87 = sphi 0, %s87
    %s89 = sphi 0, %s87
    %s90 = sphi 0, %s89
    %s104 = sphi 0, %s90
    %s108 = sphi 0, %s108
    %s110 = sphi 0, %s108
    %s111 = sphi 0, %s110
    %s125 = sphi 0, %s111
    %s131 = sphi 0, %s133
    %s134 = sphi 0, %s131
    %s135 = sphi 0, %s134
    %s151 = sphi 0, %s135
  $region4: #{conv_block_forward.1} parent=0 // loop_header_branch
    %14 = sbr.rel (%p12) target = $region8
  $region5: #{conv_block_forward.1} parent=0 // loop_body
    %s16 = ssub.s32 %s11, 1
    %s17 = ssub.s32 %s11, 2
    %s18 = sadd.s32 %s11, 1
    %s19 = ssub.s32 %s11, %s18
    %p20 = scmp.eq.s32.totalorder %s19, 0
    %s22 = sadd.s32 %s21, 1
    %s23 = scalar_select %p20, %s21, %s22
    %p26 = pneg %p20
    %p27 = scmp.eq.s32.totalorder %s11, 1
    %p28 = por %p26, %p27
    %p29 = scmp.ne.s32.totalorder %s21, %s24
    %p30 = scmp.eq.s32.totalorder %s11, 0
    %p31 = por %p29, %p30
    %p32 = scmp.ne.s32.totalorder %s21, %s24
    %p33 = scmp.eq.s32.totalorder %s16, 1
    %p34 = por %p32, %p33
    %p35 = scmp.ne.s32.totalorder %s24, %s25
    %p36 = scmp.eq.s32.totalorder %s16, 0
    %p37 = por %p35, %p36
    %p38 = scmp.ne.s32.totalorder %s24, %s25
    %p39 = scmp.eq.s32.totalorder %s17, 1
    %p40 = por %p38, %p39
    %p42 = scmp.ne.s32.totalorder %s25, %s41
    %p43 = scmp.eq.s32.totalorder %s17, 0
    %p44 = por %p42, %p43
    %s46 = sadd.s32 %s45, 1
    %p49 = scmp.eq.s32.totalorder %s11, 1
    %p50 = scmp.ne.s32.totalorder %s45, %s47
    %p51 = scmp.eq.s32.totalorder %s11, 0
    %p52 = por %p50, %p51
    %p53 = scmp.ne.s32.totalorder %s45, %s47
    %p54 = scmp.eq.s32.totalorder %s16, 1
    %p55 = por %p53, %p54
    %p56 = scmp.ne.s32.totalorder %s47, %s48
    %p57 = scmp.eq.s32.totalorder %s16, 0
    %p58 = por %p56, %p57
    %p59 = scmp.ne.s32.totalorder %s47, %s48
    %p60 = scmp.eq.s32.totalorder %s17, 1
    %p61 = por %p59, %p60
    %p63 = scmp.ne.s32.totalorder %s48, %s62
    %p64 = scmp.eq.s32.totalorder %s17, 0
    %p65 = por %p63, %p64
    %s67 = sadd.s32 %s66, 1
    %p70 = scmp.eq.s32.totalorder %s11, 1
    %p71 = scmp.ne.s32.totalorder %s66, %s68
    %p72 = scmp.eq.s32.totalorder %s11, 0
    %p73 = por %p71, %p72
    %p74 = scmp.ne.s32.totalorder %s66, %s68
    %p75 = scmp.eq.s32.totalorder %s16, 1
    %p76 = por %p74, %p75
    %p77 = scmp.ne.s32.totalorder %s68, %s69
    %p78 = scmp.eq.s32.totalorder %s16, 0
    %p79 = por %p77, %p78
    %p80 = scmp.ne.s32.totalorder %s68, %s69
    %p81 = scmp.eq.s32.totalorder %s17, 1
    %p82 = por %p80, %p81
    %p84 = scmp.ne.s32.totalorder %s69, %s83
    %p85 = scmp.eq.s32.totalorder %s17, 0
    %p86 = por %p84, %p85
    %s88 = sadd.s32 %s87, 1
    %p91 = scmp.eq.s32.totalorder %s11, 1
    %p92 = scmp.ne.s32.totalorder %s87, %s89
    %p93 = scmp.eq.s32.totalorder %s11, 0
    %p94 = por %p92, %p93
    %p95 = scmp.ne.s32.totalorder %s87, %s89
    %p96 = scmp.eq.s32.totalorder %s16, 1
    %p97 = por %p95, %p96
    %p98 = scmp.ne.s32.totalorder %s89, %s90
    %p99 = scmp.eq.s32.totalorder %s16, 0
    %p100 = por %p98, %p99
    %p101 = scmp.ne.s32.totalorder %s89, %s90
    %p102 = scmp.eq.s32.totalorder %s17, 1
    %p103 = por %p101, %p102
    %p105 = scmp.ne.s32.totalorder %s90, %s104
    %p106 = scmp.eq.s32.totalorder %s17, 0
    %p107 = por %p105, %p106
    %s109 = sadd.s32 %s108, 1
    %p112 = scmp.eq.s32.totalorder %s11, 1
    %p113 = scmp.ne.s32.totalorder %s108, %s110
    %p114 = scmp.eq.s32.totalorder %s11, 0
    %p115 = por %p113, %p114
    %p116 = scmp.ne.s32.totalorder %s108, %s110
    %p117 = scmp.eq.s32.totalorder %s16, 1
    %p118 = por %p116, %p117
    %p119 = scmp.ne.s32.totalorder %s110, %s111
    %p120 = scmp.eq.s32.totalorder %s16, 0
    %p121 = por %p119, %p120
    %p122 = scmp.ne.s32.totalorder %s110, %s111
    %p123 = scmp.eq.s32.totalorder %s17, 1
    %p124 = por %p122, %p123
    %p126 = scmp.ne.s32.totalorder %s111, %s125
    %p127 = scmp.eq.s32.totalorder %s17, 0
    %p128 = por %p126, %p127
    %s129 = ssub.s32 %s11, %s18
    %p130 = scmp.eq.s32.totalorder %s129, 0
    %s132 = sadd.s32 %s131, 1
    %s133 = scalar_select %p130, %s131, %s132
    %p136 = pneg %p130
    %p137 = scmp.eq.s32.totalorder %s11, 1
    %p138 = por %p136, %p137
    %p139 = scmp.ne.s32.totalorder %s131, %s134
    %p140 = scmp.eq.s32.totalorder %s11, 0
    %p141 = por %p139, %p140
    %p142 = scmp.ne.s32.totalorder %s131, %s134
    %p143 = scmp.eq.s32.totalorder %s16, 1
    %p144 = por %p142, %p143
    %p145 = scmp.ne.s32.totalorder %s134, %s135
    %p146 = scmp.eq.s32.totalorder %s16, 0
    %p147 = por %p145, %p146
    %p148 = scmp.ne.s32.totalorder %s134, %s135
    %p149 = scmp.eq.s32.totalorder %s17, 1
    %p150 = por %p148, %p149
    %p152 = scmp.ne.s32.totalorder %s135, %s151
    %p153 = scmp.eq.s32.totalorder %s17, 0
    %p154 = por %p152, %p153
    %p155 = scmp.le.s32.totalorder 1, %s11
    %p156 = scmp.lt.s32.totalorder %s11, 3
    %p157 = pnand %p155, %p156
    %p158 = pneg %p157
    // Predicated region
    $region9: #{conv_block_forward.1} parent=5 // pred_check
      _
    $region10: #{conv_block_forward.1} parent=5 // pred_check_branch
      %160 = sbr.rel (%p157) target = $region12
    $region11: #{conv_block_forward.1} parent=5 // pred_region
      %s161 = ssub.s32 %s11, 1
      // Predicated region
      $region13: #{conv_block_forward.1} parent=11 // pred_check
        %p162 = pneg %p58
      $region14: #{conv_block_forward.1} parent=11 // pred_check_branch
        %164 = sbr.rel (%p162) target = $region16
      $region15: #{conv_block_forward.1} parent=11 // pred_region
        _
      $region16: #{conv_block_forward.1} parent=11 // pred_fallthru
        _
      // Predicated region
      $region17: #{conv_block_forward.1} parent=11 // pred_check
        %p165 = pneg %p79
      $region18: #{conv_block_forward.1} parent=11 // pred_check_branch
        %167 = sbr.rel (%p165) target = $region20
      $region19: #{conv_block_forward.1} parent=11 // pred_region
        _
      $region20: #{conv_block_forward.1} parent=11 // pred_fallthru
        _
      // Predicated region
      $region21: #{conv_block_forward.1} parent=11 // pred_check
        %p168 = pneg %p100
      $region22: #{conv_block_forward.1} parent=11 // pred_check_branch
        %170 = sbr.rel (%p168) target = $region24
      $region23: #{conv_block_forward.1} parent=11 // pred_region
        _
      $region24: #{conv_block_forward.1} parent=11 // pred_fallthru
        _
      // Predicated region
      $region25: #{conv_block_forward.1} parent=11 // pred_check
        %p171 = pneg %p121
      $region26: #{conv_block_forward.1} parent=11 // pred_check_branch
        %173 = sbr.rel (%p171) target = $region28
      $region27: #{conv_block_forward.1} parent=11 // pred_region
        _
      $region28: #{conv_block_forward.1} parent=11 // pred_fallthru
        _
    $region12: #{conv_block_forward.1} parent=5 // pred_fallthru
      _
    %p174 = scmp.lt.s32.totalorder %s11, 2
    // Predicated region
    $region29: #{conv_block_forward.1} parent=5 // pred_check
      %p175 = pneg %p174
    $region30: #{conv_block_forward.1} parent=5 // pred_check_branch
      %177 = sbr.rel (%p175) target = $region32
    $region31: #{conv_block_forward.1} parent=5 // pred_region
      // Predicated region
      $region33: #{conv_block_forward.1} parent=31 // pred_check
        %p178 = pneg %p31
      $region34: #{conv_block_forward.1} parent=31 // pred_check_branch
        %180 = sbr.rel (%p178) target = $region36
      $region35: #{conv_block_forward.1} parent=31 // pred_region
        %p181 = scmp.lt.s32.totalorder %s11, 1
        %s182 = scalar_select %p181, %s11, 1
        %s183 = smul.addr %s182, 2
        %s184 = smul.addr %s183, 4
        %s185 = scalar_lea.vmem %s0, %s184
      $region36: #{conv_block_forward.1} parent=31 // pred_fallthru
        _
    $region32: #{conv_block_forward.1} parent=5 // pred_fallthru
      _
    %p186 = scmp.le.s32.totalorder 1, %s11
    %p187 = scmp.lt.s32.totalorder %s11, 3
    %p188 = pnand %p186, %p187
    %p189 = pneg %p188
    // Predicated region
    $region37: #{conv_block_forward.1} parent=5 // pred_check
      _
    $region38: #{conv_block_forward.1} parent=5 // pred_check_branch
      %191 = sbr.rel (%p188) target = $region40
    $region39: #{conv_block_forward.1} parent=5 // pred_region
      %s192 = ssub.s32 %s11, 1
      %p193 = scmp.lt.s32.totalorder %s16, 1
      %s194 = scalar_select %p193, %s16, 1
      %s195 = smul.addr %s194, 2
      %s196 = smul.addr %s195, 4
      %s197 = scalar_lea.vmem %s0, %s196
      %p198 = pneg %p37
      %p199 = pneg %p34
      %p200 = pneg %p58
      %p201 = pneg %p55
      %p202 = pneg %p79
      %p203 = pneg %p76
      %p204 = pneg %p100
      %p205 = pneg %p97
      %p206 = pneg %p121
      %p207 = pneg %p118
      %p208 = pneg %p147
      %p209 = pneg %p144
      %p210 = scmp.lt.s32.totalorder %s16, 1
      %s211 = scalar_select %p210, %s16, 1
      %s212 = smul.addr %s211, 2
      %s213 = smul.addr %s212, 8
      %s214 = scalar_lea.vmem %s5, %s213
      %p215 = scmp.lt.s32.totalorder %s16, 1
      %s216 = scalar_select %p215, %s16, 1
      %s217 = smul.addr %s216, 2
      %s218 = smul.addr %s217, 4
      %s219 = scalar_lea.vmem %s0, %s218
      %p220 = scmp.lt.s32.totalorder %s16, 1
      %s221 = scalar_select %p220, %s16, 1
      %s222 = smul.addr %s221, 2
      %s223 = smul.addr %s222, 8
      %s224 = scalar_lea.vmem %s5, %s223
      %v226 = vld [vmem:[%s219] sm:$0xff]
      %v227 = vunpack.c.l.bf16 %v226
      %v228 = vunpack.c.h.bf16 %v226
      %vm229 = vcmask 138240
      %230 = vst.msk [vmem:[#allocation2] sm:$0xff] %vm229, 0.0
      %vm231 = vcmask 277640
      %232 = vst.msk [vmem:[#allocation2 + $0x10] sm:$0xff] %vm231, 0.0
      %235 = vrot.lane.b32.xlu0 %v227, 17
      %v236 = vpop.permute.xlu0 %235
      %237 = vrot.lane.b32.xlu0 %v228, 17
      %v238 = vpop.permute.xlu0 %237
      %v239 = vsel %vm229, %v236, %v238
      %vm243 = vcmask 1047688
      %244 = vst.msk [vmem:[#allocation2] sm:$0xff] %vm243, %v236
      %245 = vst [vmem:[#allocation2 + $0x8] sm:$0xff] %v239
      %246 = vst.msk [vmem:[#allocation2 + $0x10] sm:$0xff] %vm229, %v238
      %v247 = vlaneseq
      %v248 = vand.u32 %v247, 127
      %v249 = vadd.s32 %v248, 128
      %vm250 = vcmp.lt.s32.totalorder %v248, 0
      %v251 = vsub.s32 0, %v248
      %v252 = vsel %vm250, %v251, %v248
      %v253 = vshrl.u32 %v252, 4
      %v254 = vand.u32 %v252, 15
      %v255 = vsub.s32 0, %v254
      %v256 = vsel %vm250, %v255, %v254
      %vm257 = vcmp.lt.s32.totalorder %v249, 0
      %v258 = vsub.s32 0, %v249
      %v259 = vsel %vm257, %v258, %v249
      %v260 = vshrl.u32 %v259, 4
      %v261 = vand.u32 %v259, 15
      %v262 = vsub.s32 0, %v261
      %v263 = vsel %vm257, %v262, %v261
      %vm264 = vcmp.ne.s32.totalorder %v256, 0
      %vm265 = vcmp.ne.s32.totalorder %v263, 0
      %vm266 = vcmp.lt.s32.totalorder %v256, 0
      %vm267 = vcmp.lt.s32.totalorder %v263, 0
      %vm268 = vmand %vm266, %vm264
      %vm269 = vmand %vm267, %vm265
      %v270 = vadd.s32 %v256, 16
      %v271 = vadd.s32 %v263, 16
      %v272 = vsel %vm268, %v270, %v256
      %v273 = vsel %vm269, %v271, %v263
      %v274 = vld [vmem:[#allocation2] sm:$0xff]
      %v275 = vld [vmem:[#allocation2 + $0x8] sm:$0xff]
      %v276 = vadd.s32 %v272, 4294967295
      %v277 = vadd.s32 %v273, 4294967295
      %vm278 = vcmp.ge.s32.totalorder %v276, 0
      %vm279 = vcmp.ge.s32.totalorder %v277, 0
      %vm280 = vcmp.lt.s32.totalorder %v276, 16
      %vm281 = vcmp.lt.s32.totalorder %v277, 16
      %vm282 = vmand %vm278, %vm280
      %vm283 = vmand %vm279, %vm281
      %v284 = vsel %vm282, 1, 0
      %v285 = vsel %vm283, 1, 0
      %vm286 = vcmp.eq.s32.totalorder %v284, 1
      %vm287 = vcmp.eq.s32.totalorder %v285, 1
      %v288 = vsel %vm286, %v274, 0.0
      %v289 = vsel %vm287, %v275, 0.0
      %v290 = vld [vmem:[#allocation2 + $0x10] sm:$0xff]
      %v291 = vadd.s32 %v272, 1
      %v292 = vadd.s32 %v273, 1
      %vm293 = vcmp.ge.s32.totalorder %v291, 0
      %vm294 = vcmp.ge.s32.totalorder %v292, 0
      %vm295 = vcmp.lt.s32.totalorder %v291, 16
      %vm296 = vcmp.lt.s32.totalorder %v292, 16
      %vm297 = vmand %vm293, %vm295
      %vm298 = vmand %vm294, %vm296
      %v299 = vsel %vm297, 1, 0
      %v300 = vsel %vm298, 1, 0
      %vm301 = vcmp.eq.s32.totalorder %v299, 1
      %vm302 = vcmp.eq.s32.totalorder %v300, 1
      %306 = vrot.lane.b32.xlu0 %v274, 126
      %v307 = vpop.permute.xlu0 %306
      %308 = vrot.lane.b32.xlu0 %v275, 126
      %v309 = vpop.permute.xlu0 %308
      %310 = vrot.lane.b32.xlu0 %v290, 126
      %v311 = vpop.permute.xlu0 %310
      %vm312 = vcmask 1031168
      %v313 = vsel %vm312, %v307, %v309
      %v314 = vsel %vm312, %v309, %v311
      %v317 = vsel %vm301, %v313, 0.0
      %v318 = vsel %vm302, %v314, 0.0
      %319 = vrot.lane.b32.xlu0 %v274, 112
      %v320 = vpop.permute.xlu0 %319
      %321 = vrot.lane.b32.xlu0 %v275, 112
      %v322 = vpop.permute.xlu0 %321
      %323 = vrot.lane.b32.xlu0 %v290, 112
      %v324 = vpop.permute.xlu0 %323
      %vm325 = vcmask 916480
      %v326 = vsel %vm325, %v320, %v322
      %v327 = vsel %vm325, %v322, %v324
      %v330 = vsel %vm286, %v326, 0.0
      %v331 = vsel %vm287, %v327, 0.0
      %332 = vrot.lane.b32.xlu0 %v274, 110
      %v333 = vpop.permute.xlu0 %332
      %334 = vrot.lane.b32.xlu0 %v275, 110
      %v335 = vpop.permute.xlu0 %334
      %336 = vrot.lane.b32.xlu0 %v290, 110
      %v337 = vpop.permute.xlu0 %336
      %vm338 = vcmask 900096
      %v339 = vsel %vm338, %v333, %v335
      %v340 = vsel %vm338, %v335, %v337
      %v343 = vsel %vm301, %v339, 0.0
      %v344 = vsel %vm302, %v340, 0.0
      %345 = vrot.lane.b32.xlu0 %v274, 96
      %v346 = vpop.permute.xlu0 %345
      %347 = vrot.lane.b32.xlu0 %v275, 96
      %v348 = vpop.permute.xlu0 %347
      %349 = vrot.lane.b32.xlu0 %v290, 96
      %v350 = vpop.permute.xlu0 %349
      %vm351 = vcmask 785408
      %v352 = vsel %vm351, %v346, %v348
      %v353 = vsel %vm351, %v348, %v350
      %v356 = vsel %vm286, %v352, 0.0
      %v357 = vsel %vm287, %v353, 0.0
      %358 = vrot.lane.b32.xlu0 %v274, 94
      %v359 = vpop.permute.xlu0 %358
      %360 = vrot.lane.b32.xlu0 %v275, 94
      %v361 = vpop.permute.xlu0 %360
      %362 = vrot.lane.b32.xlu0 %v290, 94
      %v363 = vpop.permute.xlu0 %362
      %vm364 = vcmask 769024
      %v365 = vsel %vm364, %v359, %v361
      %v366 = vsel %vm364, %v361, %v363
      %v369 = vsel %vm301, %v365, 0.0
      %v370 = vsel %vm302, %v366, 0.0
      %371 = vrot.lane.b32.xlu0 %v274, 127
      %v372 = vpop.permute.xlu0 %371
      %373 = vrot.lane.b32.xlu0 %v275, 127
      %v374 = vpop.permute.xlu0 %373
      %375 = vrot.lane.b32.xlu0 %v290, 127
      %v376 = vpop.permute.xlu0 %375
      %vm377 = vcmask 1039360
      %v378 = vsel %vm377, %v372, %v374
      %v379 = vsel %vm377, %v374, %v376
      %382 = vrot.lane.b32.xlu0 %v274, 111
      %v383 = vpop.permute.xlu0 %382
      %384 = vrot.lane.b32.xlu0 %v275, 111
      %v385 = vpop.permute.xlu0 %384
      %386 = vrot.lane.b32.xlu0 %v290, 111
      %v387 = vpop.permute.xlu0 %386
      %vm388 = vcmask 908288
      %v389 = vsel %vm388, %v383, %v385
      %v390 = vsel %vm388, %v385, %v387
      %393 = vrot.lane.b32.xlu0 %v274, 95
      %v394 = vpop.permute.xlu0 %393
      %395 = vrot.lane.b32.xlu0 %v275, 95
      %v396 = vpop.permute.xlu0 %395
      %397 = vrot.lane.b32.xlu0 %v290, 95
      %v398 = vpop.permute.xlu0 %397
      %vm399 = vcmask 777216
      %v400 = vsel %vm399, %v394, %v396
      %v401 = vsel %vm399, %v396, %v398
      %v404 = vpack.c.bf16 %v378, %v288
      %v405 = vpack.c.bf16 %v379, %v289
      %v406 = vpack.c.bf16 %v330, %v317
      %v407 = vpack.c.bf16 %v331, %v318
      %v408 = vpack.c.bf16 %v343, %v389
      %v409 = vpack.c.bf16 %v344, %v390
      %v410 = vpack.c.bf16 %v400, %v356
      %v411 = vpack.c.bf16 %v401, %v357
      %v412 = vpack.c.bf16 %v369, %v369
      %v413 = vpack.c.bf16 %v370, %v370
      %v414 = vld [vmem:[%s1] sm:$0xf]
      %vm415 = vcmask 588800
      %v417 = vsel %vm415, %v414, 0
      %vm419 = vcmask 1043456
      %v421 = vsel %vm419, %v412, 0
      %v424 = vsel %vm419, %v413, 0
      %426 = vmatprep.subr.bf16.mxu0 0
      %427 = vmatpush1.bf16.msra.mxu0 0
      %428 = vmatprep.subr.bf16.mxu0 0
      %429 = vmatpush1.bf16.msra.mxu0 0
      %430 = vmatprep.subr.bf16.mxu0 0
      %431 = vmatpush1.bf16.msra.mxu0 0
      %432 = vmatprep.subr.bf16.mxu0 %v424
      %433 = vmatpush1.bf16.msra.mxu0 %v421
      %434 = vmatprep.subr.bf16.mxu0 %v411
      %435 = vmatpush1.bf16.msra.mxu0 %v410
      %436 = vmatprep.subr.bf16.mxu0 %v409
      %437 = vmatpush1.bf16.msra.mxu0 %v408
      %438 = vmatprep.subr.bf16.mxu0 %v407
      %439 = vmatpush1.bf16.msra.mxu0 %v406
      %440 = vmatprep.subr.bf16.mxu0 %v405
      %441 = vmatpush1.bf16.msra.mxu0 %v404
      %442 = vmatprep.subr.bf16.mxu0 0
      %443 = vmatpush2.bf16.msra.mxu0 0
      %444 = vmatprep.subr.bf16.mxu0 0
      %445 = vmatpush2.bf16.msra.mxu0 0
      %446 = vmatprep.subr.bf16.mxu0 0
      %447 = vmatpush2.bf16.msra.mxu0 0
      %448 = vmatprep.subr.bf16.mxu0 0
      %449 = vmatpush2.bf16.msra.mxu0 0
      %450 = vmatprep.subr.bf16.mxu0 0
      %451 = vmatpush2.bf16.msra.mxu0 0
      %452 = vmatprep.subr.bf16.mxu0 0
      %453 = vmatpush2.bf16.msra.mxu0 0
      %454 = vmatprep.subr.bf16.mxu0 0
      %455 = vmatpush2.bf16.msra.mxu0 0
      %456 = vmatprep.subr.bf16.mxu0 0
      %457 = vmatpush2.bf16.msra.mxu0 0
      %458 = vmatprep.mubr.bf16.mxu0 0
      %459 = vmatmul.mubr.bf16.gmra.mxu0 %v417
      %v460 = vpop.f32.mrf.mxu0
      %v461 = vadd.f32 0.0, %v460
      %v462 = vpop.f32.mrf.mxu0
      %v463 = vadd.f32 0.0, %v462
      %v464 = vpop.f32.mrf.mxu0
      %v465 = vpop.f32.mrf.mxu0
      %466 = vdwg.mxu0
      %v467 = vadd.f32 %v461, %v463
      %468 = vadd.xlane.f32.xlu0 %v467
      %v469 = vpop.xlane.xlu0 %468
      %v470 = vrcp.pop 256.0
      %v471 = vmul.f32 %v469, %v470
      %v472 = vsub.f32 %v461, %v471
      %v473 = vsub.f32 %v463, %v471
      %v474 = vmul.f32 %v472, %v472
      %v475 = vmul.f32 %v473, %v473
      %v476 = vadd.f32 %v474, %v475
      %477 = vadd.xlane.f32.xlu0 %v476
      %v478 = vpop.xlane.xlu0 %477
      %v479 = vmul.f32 %v478, %v470
      %v480 = vadd.f32 %v479, 1e-05
      %v481 = vrsqrt.pop %v480
      %v482 = vmul.f32 %v472, %v481
      %v483 = vmul.f32 %v473, %v481
      %vm484 = vcmp.ge.f32.partialorder %v482, 0.0
      %vm485 = vcmp.ge.f32.partialorder %v483, 0.0
      %v486 = vmul.f32 %v482, 0.2
      %v487 = vmul.f32 %v483, 0.2
      %v488 = vsel %vm484, %v482, %v486
      %v489 = vsel %vm485, %v483, %v487
      %490 = vst.msk [vmem:[#allocation3] sm:$0xff] %vm229, 0.0
      %491 = vst.msk [vmem:[#allocation3 + $0x10] sm:$0xff] %vm231, 0.0
      %494 = vrot.lane.b32.xlu0 %v488, 17
      %v495 = vpop.permute.xlu0 %494
      %496 = vrot.lane.b32.xlu0 %v489, 17
      %v497 = vpop.permute.xlu0 %496
      %v498 = vsel %vm229, %v495, %v497
      %502 = vst.msk [vmem:[#allocation3] sm:$0xff] %vm243, %v495
      %503 = vst [vmem:[#allocation3 + $0x8] sm:$0xff] %v498
      %504 = vst.msk [vmem:[#allocation3 + $0x10] sm:$0xff] %vm229, %v497
      %v505 = vld [vmem:[#allocation3] sm:$0xff]
      %v506 = vld [vmem:[#allocation3 + $0x8] sm:$0xff]
      %v507 = vsel %vm286, %v505, 0.0
      %v508 = vsel %vm287, %v506, 0.0
      %v509 = vld [vmem:[#allocation3 + $0x10] sm:$0xff]
      %513 = vrot.lane.b32.xlu0 %v505, 126
      %v514 = vpop.permute.xlu0 %513
      %515 = vrot.lane.b32.xlu0 %v506, 126
      %v516 = vpop.permute.xlu0 %515
      %517 = vrot.lane.b32.xlu0 %v509, 126
      %v518 = vpop.permute.xlu0 %517
      %v519 = vsel %vm312, %v514, %v516
      %v520 = vsel %vm312, %v516, %v518
      %v523 = vsel %vm301, %v519, 0.0
      %v524 = vsel %vm302, %v520, 0.0
      %525 = vrot.lane.b32.xlu0 %v505, 112
      %v526 = vpop.permute.xlu0 %525
      %527 = vrot.lane.b32.xlu0 %v506, 112
      %v528 = vpop.permute.xlu0 %527
      %529 = vrot.lane.b32.xlu0 %v509, 112
      %v530 = vpop.permute.xlu0 %529
      %v531 = vsel %vm325, %v526, %v528
      %v532 = vsel %vm325, %v528, %v530
      %v535 = vsel %vm286, %v531, 0.0
      %v536 = vsel %vm287, %v532, 0.0
      %537 = vrot.lane.b32.xlu0 %v505, 110
      %v538 = vpop.permute.xlu0 %537
      %539 = vrot.lane.b32.xlu0 %v506, 110
      %v540 = vpop.permute.xlu0 %539
      %541 = vrot.lane.b32.xlu0 %v509, 110
      %v542 = vpop.permute.xlu0 %541
      %v543 = vsel %vm338, %v538, %v540
      %v544 = vsel %vm338, %v540, %v542
      %v547 = vsel %vm301, %v543, 0.0
      %v548 = vsel %vm302, %v544, 0.0
      %549 = vrot.lane.b32.xlu0 %v505, 96
      %v550 = vpop.permute.xlu0 %549
      %551 = vrot.lane.b32.xlu0 %v506, 96
      %v552 = vpop.permute.xlu0 %551
      %553 = vrot.lane.b32.xlu0 %v509, 96
      %v554 = vpop.permute.xlu0 %553
      %v555 = vsel %vm351, %v550, %v552
      %v556 = vsel %vm351, %v552, %v554
      %v559 = vsel %vm286, %v555, 0.0
      %v560 = vsel %vm287, %v556, 0.0
      %561 = vrot.lane.b32.xlu0 %v505, 94
      %v562 = vpop.permute.xlu0 %561
      %563 = vrot.lane.b32.xlu0 %v506, 94
      %v564 = vpop.permute.xlu0 %563
      %565 = vrot.lane.b32.xlu0 %v509, 94
      %v566 = vpop.permute.xlu0 %565
      %v567 = vsel %vm364, %v562, %v564
      %v568 = vsel %vm364, %v564, %v566
      %v571 = vsel %vm301, %v567, 0.0
      %v572 = vsel %vm302, %v568, 0.0
      %573 = vrot.lane.b32.xlu0 %v505, 127
      %v574 = vpop.permute.xlu0 %573
      %575 = vrot.lane.b32.xlu0 %v506, 127
      %v576 = vpop.permute.xlu0 %575
      %577 = vrot.lane.b32.xlu0 %v509, 127
      %v578 = vpop.permute.xlu0 %577
      %v579 = vsel %vm377, %v574, %v576
      %v580 = vsel %vm377, %v576, %v578
      %583 = vrot.lane.b32.xlu0 %v505, 111
      %v584 = vpop.permute.xlu0 %583
      %585 = vrot.lane.b32.xlu0 %v506, 111
      %v586 = vpop.permute.xlu0 %585
      %587 = vrot.lane.b32.xlu0 %v509, 111
      %v588 = vpop.permute.xlu0 %587
      %v589 = vsel %vm388, %v584, %v586
      %v590 = vsel %vm388, %v586, %v588
      %593 = vrot.lane.b32.xlu0 %v505, 95
      %v594 = vpop.permute.xlu0 %593
      %595 = vrot.lane.b32.xlu0 %v506, 95
      %v596 = vpop.permute.xlu0 %595
      %597 = vrot.lane.b32.xlu0 %v509, 95
      %v598 = vpop.permute.xlu0 %597
      %v599 = vsel %vm399, %v594, %v596
      %v600 = vsel %vm399, %v596, %v598
      %v603 = vpack.c.bf16 %v579, %v507
      %v604 = vpack.c.bf16 %v580, %v508
      %v605 = vpack.c.bf16 %v535, %v523
      %v606 = vpack.c.bf16 %v536, %v524
      %v607 = vpack.c.bf16 %v547, %v589
      %v608 = vpack.c.bf16 %v548, %v590
      %v609 = vpack.c.bf16 %v599, %v559
      %v610 = vpack.c.bf16 %v600, %v560
      %v611 = vpack.c.bf16 %v571, %v571
      %v612 = vpack.c.bf16 %v572, %v572
      %v613 = vld [vmem:[%s2] sm:$0xf]
      %v615 = vsel %vm415, %v613, 0
      %v618 = vsel %vm419, %v611, 0
      %v621 = vsel %vm419, %v612, 0
      %623 = vmatprep.subr.bf16.mxu0 0
      %624 = vmatpush1.bf16.msra.mxu0 0
      %625 = vmatprep.subr.bf16.mxu0 0
      %626 = vmatpush1.bf16.msra.mxu0 0
      %627 = vmatprep.subr.bf16.mxu0 0
      %628 = vmatpush1.bf16.msra.mxu0 0
      %629 = vmatprep.subr.bf16.mxu0 %v621
      %630 = vmatpush1.bf16.msra.mxu0 %v618
      %631 = vmatprep.subr.bf16.mxu0 %v610
      %632 = vmatpush1.bf16.msra.mxu0 %v609
      %633 = vmatprep.subr.bf16.mxu0 %v608
      %634 = vmatpush1.bf16.msra.mxu0 %v607
      %635 = vmatprep.subr.bf16.mxu0 %v606
      %636 = vmatpush1.bf16.msra.mxu0 %v605
      %637 = vmatprep.subr.bf16.mxu0 %v604
      %638 = vmatpush1.bf16.msra.mxu0 %v603
      %639 = vmatprep.subr.bf16.mxu0 0
      %640 = vmatpush2.bf16.msra.mxu0 0
      %641 = vmatprep.subr.bf16.mxu0 0
      %642 = vmatpush2.bf16.msra.mxu0 0
      %643 = vmatprep.subr.bf16.mxu0 0
      %644 = vmatpush2.bf16.msra.mxu0 0
      %645 = vmatprep.subr.bf16.mxu0 0
      %646 = vmatpush2.bf16.msra.mxu0 0
      %647 = vmatprep.subr.bf16.mxu0 0
      %648 = vmatpush2.bf16.msra.mxu0 0
      %649 = vmatprep.subr.bf16.mxu0 0
      %650 = vmatpush2.bf16.msra.mxu0 0
      %651 = vmatprep.subr.bf16.mxu0 0
      %652 = vmatpush2.bf16.msra.mxu0 0
      %653 = vmatprep.subr.bf16.mxu0 0
      %654 = vmatpush2.bf16.msra.mxu0 0
      %655 = vmatprep.mubr.bf16.mxu0 0
      %656 = vmatmul.mubr.bf16.gmra.mxu0 %v615
      %v657 = vpop.f32.mrf.mxu0
      %v658 = vadd.f32 0.0, %v657
      %v659 = vpop.f32.mrf.mxu0
      %v660 = vadd.f32 0.0, %v659
      %v661 = vpop.f32.mrf.mxu0
      %v662 = vpop.f32.mrf.mxu0
      %663 = vdwg.mxu0
      %v664 = vadd.f32 %v658, %v660
      %665 = vadd.xlane.f32.xlu0 %v664
      %v666 = vpop.xlane.xlu0 %665
      %v667 = vmul.f32 %v666, %v470
      %v668 = vsub.f32 %v658, %v667
      %v669 = vsub.f32 %v660, %v667
      %v670 = vmul.f32 %v668, %v668
      %v671 = vmul.f32 %v669, %v669
      %v672 = vadd.f32 %v670, %v671
      %673 = vadd.xlane.f32.xlu0 %v672
      %v674 = vpop.xlane.xlu0 %673
      %v675 = vmul.f32 %v674, %v470
      %v676 = vadd.f32 %v675, 1e-05
      %v677 = vrsqrt.pop %v676
      %v678 = vmul.f32 %v668, %v677
      %v679 = vmul.f32 %v669, %v677
      %vm680 = vcmp.ge.f32.partialorder %v678, 0.0
      %vm681 = vcmp.ge.f32.partialorder %v679, 0.0
      %v682 = vmul.f32 %v678, 0.2
      %v683 = vmul.f32 %v679, 0.2
      %v684 = vsel %vm680, %v678, %v682
      %v685 = vsel %vm681, %v679, %v683
      %v686 = vld [vmem:[%s3] sm:$0xff]
      %688 = vset.pattern.permute.xlu0 0
      %689 = vperm.xlu0 %688, %v686
      %v690 = vpop.permute.xlu0 %689
      %v692 = vmul.f32 %v684, %v690
      %v693 = vmul.f32 %v685, %v690
      %v694 = vrot.slane %v692, 4
      %v695 = vadd.f32 %v692, %v694
      %v696 = vrot.slane %v695, 2
      %v697 = vadd.f32 %v695, %v696
      %v698 = vrot.slane %v697, 1
      %v699 = vadd.f32 %v697, %v698
      %v700 = vrot.slane %v693, 4
      %v701 = vadd.f32 %v693, %v700
      %v702 = vrot.slane %v701, 2
      %v703 = vadd.f32 %v701, %v702
      %v704 = vrot.slane %v703, 1
      %v705 = vadd.f32 %v703, %v704
      %v706 = vxor.u32 %v699, 2147483648
      %v707 = vxor.u32 %v705, 2147483648
      %v708 = vmul.f32 %v706, 1.442695
      %v709 = vpow.pop %v708
      %v710 = vmul.f32 %v707, 1.442695
      %v711 = vpow.pop %v710
      %v712 = vadd.f32 %v709, 1.0
      %v713 = vadd.f32 %v711, 1.0
      %v714 = vrcp.pop %v712
      %v715 = vmul.f32 1.0, %v714
      %v716 = vrcp.pop %v713
      %v717 = vmul.f32 1.0, %v716
      %v718 = vmul.f32 %v715, %v684
      %v719 = vmul.f32 %v717, %v685
      %v720 = vand.u32 2147483647, %v684
      %v721 = vand.u32 2147483647, %v685
      %v722 = vadd.f32 %v720, %v721
      %723 = vadd.xlane.f32.xlu0 %v722
      %v724 = vpop.xlane.xlu0 %723
      %v725 = vld [vmem:[%s4] sm:$0xff]
      %vm726 = vcmask 64512
      %v728 = vsel %vm726, %v725, 0
      %730 = vmatprep.subr.mxu0 0.0
      %731 = vmatpush1.msra.mxu0 0.0
      %732 = vmatprep.subr.mxu0 0.0
      %733 = vmatpush1.msra.mxu0 0.0
      %734 = vmatprep.subr.mxu0 0.0
      %735 = vmatpush1.msra.mxu0 0.0
      %736 = vmatprep.subr.mxu0 0.0
      %737 = vmatpush1.msra.mxu0 0.0
      %738 = vmatprep.subr.mxu0 0.0
      %739 = vmatpush1.msra.mxu0 0.0
      %740 = vmatprep.subr.mxu0 0.0
      %741 = vmatpush1.msra.mxu0 0.0
      %742 = vmatprep.subr.mxu0 0.0
      %743 = vmatpush1.msra.mxu0 0.0
      %744 = vmatprep.subr.mxu0 0.0
      %745 = vmatpush1.msra.mxu0 0.0
      %746 = vmatprep.subr.mxu0 0.0
      %747 = vmatpush1.msra.mxu0 0.0
      %748 = vmatprep.subr.mxu0 0.0
      %749 = vmatpush1.msra.mxu0 0.0
      %750 = vmatprep.subr.mxu0 0.0
      %751 = vmatpush1.msra.mxu0 0.0
      %752 = vmatprep.subr.mxu0 0.0
      %753 = vmatpush1.msra.mxu0 0.0
      %754 = vmatprep.subr.mxu0 0.0
      %755 = vmatpush1.msra.mxu0 0.0
      %756 = vmatprep.subr.mxu0 0.0
      %757 = vmatpush1.msra.mxu0 0.0
      %758 = vmatprep.subr.mxu0 0.0
      %759 = vmatpush1.msra.mxu0 0.0
      %760 = vmatprep.subr.mxu0 0.0
      %761 = vmatpush1.msra.mxu0 %v724
      %762 = vmatprep.subr.mxu0 0.0
      %763 = vmatpush2.msra.mxu0 0.0
      %764 = vmatprep.subr.mxu0 0.0
      %765 = vmatpush2.msra.mxu0 0.0
      %766 = vmatprep.subr.mxu0 0.0
      %767 = vmatpush2.msra.mxu0 0.0
      %768 = vmatprep.subr.mxu0 0.0
      %769 = vmatpush2.msra.mxu0 0.0
      %770 = vmatprep.subr.mxu0 0.0
      %771 = vmatpush2.msra.mxu0 0.0
      %772 = vmatprep.subr.mxu0 0.0
      %773 = vmatpush2.msra.mxu0 0.0
      %774 = vmatprep.subr.mxu0 0.0
      %775 = vmatpush2.msra.mxu0 0.0
      %776 = vmatprep.subr.mxu0 0.0
      %777 = vmatpush2.msra.mxu0 0.0
      %778 = vmatprep.subr.mxu0 0.0
      %779 = vmatpush2.msra.mxu0 0.0
      %780 = vmatprep.subr.mxu0 0.0
      %781 = vmatpush2.msra.mxu0 0.0
      %782 = vmatprep.subr.mxu0 0.0
      %783 = vmatpush2.msra.mxu0 0.0
      %784 = vmatprep.subr.mxu0 0.0
      %785 = vmatpush2.msra.mxu0 0.0
      %786 = vmatprep.subr.mxu0 0.0
      %787 = vmatpush2.msra.mxu0 0.0
      %788 = vmatprep.subr.mxu0 0.0
      %789 = vmatpush2.msra.mxu0 0.0
      %790 = vmatprep.subr.mxu0 0.0
      %791 = vmatpush2.msra.mxu0 0.0
      %792 = vmatprep.subr.mxu0 0.0
      %793 = vmatpush2.msra.mxu0 0.0
      %794 = vmatprep.mubr.f32.mxu0 0.0
      %795 = vmatmul.mubr.f32.gmra.mxu0 %v728
      %v796 = vpop.f32.mrf.mxu0
      %v797 = vadd.f32 0.0, %v796
      %v798 = vpop.f32.mrf.mxu0
      %799 = vdwg.mxu0
      %v800 = vxor.u32 %v797, 2147483648
      %v801 = vmul.f32 %v800, 1.442695
      %v802 = vpow.pop %v801
      %v803 = vadd.f32 %v802, 1.0
      %v804 = vrcp.pop %v803
      %v805 = vmul.f32 1.0, %v804
      %807 = vset.pattern.permute.xlu0 0
      %808 = vperm.xlu0 %807, %v805
      %v809 = vpop.permute.xlu0 %808
      %v811 = vmul.f32 %v809, %v684
      %v812 = vmul.f32 %v809, %v685
      %v813 = vmax.f32 %v718, %v811
      %v814 = vmax.f32 %v719, %v812
      %815 = vst [vmem:[%s224] sm:$0xff] %v813
      %816 = vst [vmem:[%s224 + $0x8] sm:$0xff] %v814
      %p817 = scmp.lt.s32.totalorder %s16, 1
      %s818 = scalar_select %p817, %s16, 1
      %s819 = smul.addr %s818, 2
      %s820 = smul.addr %s819, 8
      %s821 = scalar_lea.vmem %s5, %s820
      // Predicated region
      $region41: #{conv_block_forward.1} parent=39 // pred_check
        %p822 = pneg %p144
      $region42: #{conv_block_forward.1} parent=39 // pred_check_branch
        %824 = sbr.rel (%p822) target = $region44
      $region43: #{conv_block_forward.1} parent=39 // pred_region
        _
      $region44: #{conv_block_forward.1} parent=39 // pred_fallthru
        _
    $region40: #{conv_block_forward.1} parent=5 // pred_fallthru
      _
    %p825 = scmp.le.s32.totalorder 2, %s11
    // Predicated region
    $region45: #{conv_block_forward.1} parent=5 // pred_check
      %p826 = pneg %p825
    $region46: #{conv_block_forward.1} parent=5 // pred_check_branch
      %828 = sbr.rel (%p826) target = $region48
    $region47: #{conv_block_forward.1} parent=5 // pred_region
      %s829 = ssub.s32 %s11, 2
      // Predicated region
      $region49: #{conv_block_forward.1} parent=47 // pred_check
        %p830 = pneg %p150
      $region50: #{conv_block_forward.1} parent=47 // pred_check_branch
        %832 = sbr.rel (%p830) target = $region52
      $region51: #{conv_block_forward.1} parent=47 // pred_region
        %p833 = scmp.lt.s32.totalorder %s17, 1
        %s834 = scalar_select %p833, %s17, 1
        %s835 = smul.addr %s834, 2
        %s836 = smul.addr %s835, 8
        %s837 = scalar_lea.vmem %s5, %s836
      $region52: #{conv_block_forward.1} parent=47 // pred_fallthru
        _
    $region48: #{conv_block_forward.1} parent=5 // pred_fallthru
      _
  $region6: #{conv_block_forward.1} parent=0 // loop_footer
    %s15 = sadd.s32 1, %s11
  $region7: #{conv_block_forward.1} parent=0 // loop_footer_branch
    %10 = sbr.rel target = $region3
  $region8: #{conv_block_forward.1} parent=0 // loop_exit
    _

</llo_original>
